<compile_context>
chip_gen: v5e
topology: v5e:2x2
jax: 0.10.0
libtpu: 0.0.40
codegen_flags: <defaults>
</compile_context>

<pallas_src>
import functools

import jax
import jax.numpy as jnp
import numpy as np
from jax import lax
from jax.experimental import pallas as pl
from jax.experimental.pallas import tpu as pltpu


def _round_up(x, m):
    return ((x + m - 1) // m) * m


def _vmem_budget():
    """Generation-aware VMEM budget (~75% of physical capacity)."""
    cap = None
    try:
        cap = int(pltpu.get_tpu_info().vmem_capacity_bytes)
    except Exception:
        cap = None
    if cap is None or cap <= 0:
        try:
            kind = jax.devices()[0].device_kind.lower()
            cap = 64 * 2**20 if "v7" in kind else 128 * 2**20
        except Exception:
            cap = 64 * 2**20
    return (cap * 3) // 4


def _num_tensorcores():
    try:
        kind = jax.devices()[0].device_kind.lower()
        return 2 if "v7" in kind else 1
    except Exception:
        return 1


def _default_gate_dtype(compute_dtype):
    """bf16 gate nonlinearities only where the EUP supports bf16 (v6e/v7x)."""
    if jnp.dtype(compute_dtype) == jnp.dtype(jnp.float32):
        return jnp.float32
    try:
        kind = jax.devices()[0].device_kind.lower()
    except Exception:
        return jnp.float32
    if "v6" in kind or "v7" in kind:
        return compute_dtype
    return jnp.float32  # v5e: no bf16 VPU/EUP -> keep elementwise math in f32


# --------------------- fused x-projection kernel (MXU) ----------------------
def _xproj_kernel(x_ref, w_ref, b_ref, o_ref):
    # (RT, D) @ (D, n_tile) + (1, n_tile), f32 accumulation, store compute dtype
    o_ref[...] = (jnp.dot(x_ref[...], w_ref[...],
                          preferred_element_type=jnp.float32)
                  + b_ref[...]).astype(o_ref.dtype)


def _choose_xproj_tiles(rows, d_pad, hp5, h_pad, in_dsize, out_dsize, budget):
    n_candidates = [hp5]
    if h_pad < hp5:
        n_candidates.append(h_pad)
    if 128 < h_pad:
        n_candidates.append(128)
    rt_candidates = [t for t in (1024, 512, 256, 128, 64, 32, 16, 8) if t <= rows]
    if not rt_candidates:
        rt_candidates = [max(8, _round_up(rows, 8))]
    for n_tile in n_candidates:
        for rt in rt_candidates:
            est = (2 * rt * d_pad * in_dsize        # double-buffered x blocks
                   + 2 * d_pad * n_tile * in_dsize  # weight block
                   + 2 * n_tile * 4                 # bias block
                   + 2 * rt * n_tile * out_dsize)   # double-buffered out blocks
            if est <= budget:
                return rt, n_tile
    return rt_candidates[-1], n_candidates[-1]


def _x_projection(x_rows, w_x, b_x, *, out_dtype, budget):
    rows, d_pad = x_rows.shape
    hp5 = w_x.shape[1]
    h_pad = hp5 // 5
    row_tile, n_tile = _choose_xproj_tiles(
        rows, d_pad, hp5, h_pad,
        jnp.dtype(x_rows.dtype).itemsize, jnp.dtype(out_dtype).itemsize, budget)
    rows_pad = _round_up(rows, row_tile)
    if rows_pad != rows:
        x_rows = jnp.pad(x_rows, ((0, rows_pad - rows), (0, 0)))

    out = pl.pallas_call(
        _xproj_kernel,
        out_shape=jax.ShapeDtypeStruct((rows_pad, hp5), out_dtype),
        grid_spec=pltpu.PrefetchScalarGridSpec(
            num_scalar_prefetch=0,
            grid=(rows_pad // row_tile, hp5 // n_tile),
            in_specs=[
                pl.BlockSpec((row_tile, d_pad), lambda r, n: (r, 0)),
                pl.BlockSpec((d_pad, n_tile), lambda r, n: (0, n)),
                pl.BlockSpec((1, n_tile), lambda r, n: (0, n)),
            ],
            out_specs=pl.BlockSpec((row_tile, n_tile), lambda r, n: (r, n)),
        ),
        compiler_params=pltpu.CompilerParams(
            dimension_semantics=("parallel", "parallel"),
            vmem_limit_bytes=int(budget),
        ),
    )(x_rows, w_x, b_x)
    return out[:rows]


# --------------------------- recurrent kernel --------------------------------
def _mlstm_recurrent_kernel(xproj_ref, mask_ref, wmh_ref, wh_ref,
                            y_ref, hN_ref, cN_ref,
                            h_sc, c_sc, *, hidden_pad, seq_tile,
                            compute_dtype, gate_dtype):
    t = pl.program_id(1)
    HP = hidden_pad

    @pl.when(t == 0)
    def _():
        # state=None in the reference -> zero-initialized (h, c)
        h_sc[...] = jnp.zeros_like(h_sc)
        c_sc[...] = jnp.zeros_like(c_sc)

    # small recurrent weights stay resident; hoist the loads out of the loop
    wmh = wmh_ref[...]
    wh = wh_ref[...]

    def _sig(v):
        return jax.nn.sigmoid(v.astype(gate_dtype)).astype(jnp.float32)

    def _tanh(v):
        return jnp.tanh(v.astype(gate_dtype)).astype(jnp.float32)

    def step(i, carry):
        h_prev, c_prev = carry
        xp = xproj_ref[i].astype(jnp.float32)   # (BB, 5*HP): [x@wmx | x@wx + b]
        keep = mask_ref[i]                      # (BB, 1) float mask

        # m = (x@wmx) * (h@wmh)
        m = xp[:, 0:HP] * jnp.dot(h_prev.astype(compute_dtype), wmh,
                                  preferred_element_type=jnp.float32)
        # gates = (x@wx + b) + m@wh   (torch chunk order: i, f, o, g)
        gates = xp[:, HP:] + jnp.dot(m.astype(compute_dtype), wh,
                                     preferred_element_type=jnp.float32)

        i_g = _sig(gates[:, 0 * HP:1 * HP])
        f_g = _sig(gates[:, 1 * HP:2 * HP])
        o_g = _sig(gates[:, 2 * HP:3 * HP])
        c_g = _tanh(gates[:, 3 * HP:4 * HP])

        cy = f_g * c_prev + i_g * c_g
        hy = o_g * _tanh(cy)

        # reference semantics: blend with the (possibly fractional) mask
        hy = keep * hy + (1.0 - keep) * h_prev
        cy = keep * cy + (1.0 - keep) * c_prev

        y_ref[i] = hy.astype(y_ref.dtype)
        return hy, cy

    h, c = lax.fori_loop(0, seq_tile, step, (h_sc[...], c_sc[...]),
                         unroll=min(seq_tile, 8))
    h_sc[...] = h
    c_sc[...] = c

    # final-state outputs: write only on the last time tile
    @pl.when(t == pl.num_programs(1) - 1)
    def _():
        hN_ref[...] = h.astype(hN_ref.dtype)
        cN_ref[...] = c.astype(cN_ref.dtype)


def _fit_recurrent_tiles(TT, BB, HP, dsize, budget):
    def nbytes(tt, bb):
        blocks = 2 * (tt * bb * 5 * HP * dsize   # xproj block
                      + tt * bb * 4              # mask block
                      + tt * bb * HP * dsize)    # y block
        weights = (HP * HP + HP * 4 * HP) * dsize
        state = 2 * bb * HP * 4                  # h/c scratch
        finals = 2 * 2 * bb * HP * 4             # hN/cN output buffers
        return blocks + weights + state + finals
    while nbytes(TT, BB) > budget and TT > 1:
        TT = max(1, TT // 2)
    while nbytes(TT, BB) > budget and BB > 8:
        BB = max(8, BB // 2)
    return TT, BB


def _mlstm_layer(xproj, mask_tb1, wmh_p, wh_p, *, batch_tile, seq_tile,
                 hidden_pad, compute_dtype, gate_dtype, budget):
    T_pad, B_pad, HP5 = xproj.shape
    HP, BB, TT = hidden_pad, batch_tile, seq_tile

    kernel = functools.partial(_mlstm_recurrent_kernel, hidden_pad=HP,
                               seq_tile=TT, compute_dtype=compute_dtype,
                               gate_dtype=gate_dtype)

    y, h_final, c_final = pl.pallas_call(
        kernel,
        out_shape=(
            jax.ShapeDtypeStruct((T_pad, B_pad, HP), compute_dtype),
            jax.ShapeDtypeStruct((B_pad, HP), jnp.float32),
            jax.ShapeDtypeStruct((B_pad, HP), jnp.float32),
        ),
        grid_spec=pltpu.PrefetchScalarGridSpec(
            num_scalar_prefetch=0,
            grid=(B_pad // BB, T_pad // TT),
            in_specs=[
                pl.BlockSpec((TT, BB, HP5), lambda b, t: (t, b, 0)),   # x proj
                pl.BlockSpec((TT, BB, 1), lambda b, t: (t, b, 0)),     # mask
                pl.BlockSpec((HP, HP), lambda b, t: (0, 0)),           # wmh
                pl.BlockSpec((HP, 4 * HP), lambda b, t: (0, 0)),       # wh
            ],
            out_specs=[
                pl.BlockSpec((TT, BB, HP), lambda b, t: (t, b, 0)),    # y
                pl.BlockSpec((BB, HP), lambda b, t: (b, 0)),           # final h
                pl.BlockSpec((BB, HP), lambda b, t: (b, 0)),           # final c
            ],
            scratch_shapes=[
                pltpu.VMEM((BB, HP), jnp.float32),                     # h state
                pltpu.VMEM((BB, HP), jnp.float32),                     # c state
            ],
        ),
        compiler_params=pltpu.CompilerParams(
            # batch chunks are independent (megacore on v7x); time is sequential
            dimension_semantics=("parallel", "arbitrary"),
            vmem_limit_bytes=int(budget),
        ),
    )(xproj, mask_tb1, wmh_p, wh_p)
    return y, h_final, c_final


# ---------------------------- parameter prep ---------------------------------
def _pad_gates(w, rows_pad, H, H_pad):
    """(rows, 4H) -> (rows_pad, 4*H_pad) with each H-wide gate block padded."""
    rows = w.shape[0]
    w4 = w.reshape(rows, 4, H)
    w4 = jnp.pad(w4, ((0, rows_pad - rows), (0, 0), (0, H_pad - H)))
    return w4.reshape(rows_pad, 4 * H_pad)


def prepare_mlstm_params(params, *, compute_dtype=jnp.bfloat16):
    """One-time padding / fusion of the per-layer weights (hoisted out of the
    forward pass so repeated calls don't re-materialize weight copies)."""
    H = params[0]["wmx"].shape[1]
    H_pad = _round_up(H, 128)                    # lane aligned
    layers = []
    for layer in params:
        d_in = layer["wmx"].shape[0]
        D_pad = _round_up(d_in, 128)
        wmx_p = jnp.pad(layer["wmx"], ((0, D_pad - d_in), (0, H_pad - H)))
        wx_p = _pad_gates(layer["wx"], D_pad, H, H_pad)
        w_x = jnp.concatenate([wmx_p, wx_p], axis=1).astype(compute_dtype)
        b_x = jnp.concatenate([jnp.zeros((1, H_pad), jnp.float32),
                               _pad_gates(layer["b"], 1, H, H_pad)], axis=1)
        wmh_p = jnp.pad(layer["wmh"],
                        ((0, H_pad - H), (0, H_pad - H))).astype(compute_dtype)
        wh_p = _pad_gates(layer["wh"], H_pad, H, H_pad).astype(compute_dtype)
        layers.append(dict(w_x=w_x, b_x=b_x, wmh=wmh_p, wh=wh_p,
                           d_in=d_in, D_pad=D_pad))
    return dict(layers=layers, H=H, H_pad=H_pad,
                compute_dtype=jnp.dtype(compute_dtype))


# --------------------------------- wrapper ------------------------------------
def mlstm_forward(params, x_btd, mask_bt=None, *, compute_dtype=jnp.bfloat16,
                  seq_tile=32, batch_tile=None):
    """Full mLSTM stack. x_btd: (B, T, D) batch-major like the torch module.

    `params` may be the raw per-layer dicts or the output of
    prepare_mlstm_params (preferred: weight prep is then done once).
    Returns (output (B, T, H), [(h_i, c_i)] per layer)."""
    if isinstance(params, dict) and "layers" in params:
        prepped = params
        compute_dtype = prepped["compute_dtype"]
    else:
        prepped = prepare_mlstm_params(params, compute_dtype=compute_dtype)

    B, T, _ = x_btd.shape
    H, H_pad = prepped["H"], prepped["H_pad"]
    gate_dtype = _default_gate_dtype(compute_dtype)
    budget = _vmem_budget()
    dsize = jnp.dtype(compute_dtype).itemsize

    if mask_bt is None:
        mask = jnp.ones((B, T, 1), jnp.float32)
    elif mask_bt.ndim == 2:
        mask = mask_bt[..., None].astype(jnp.float32)
    else:
        mask = mask_bt.astype(jnp.float32)

    # --- recurrent tile selection (big batch tile, VMEM-budgeted) -----------
    b8 = _round_up(B, 8)
    cap = 128 if batch_tile is None else max(8, _round_up(batch_tile, 8))
    BB = max(8, min(cap, b8, 128))
    # keep >= 2 batch chunks when the chip has 2 TensorCores and batch allows
    if batch_tile is None and _num_tensorcores() >= 2 and b8 >= 16 and b8 // BB < 2:
        BB = min(BB, _round_up(b8 // 2, 8))
    TT = max(1, min(seq_tile, T))
    TT, BB = _fit_recurrent_tiles(TT, BB, H_pad, dsize, budget)

    B_pad = _round_up(B, BB)
    T_pad = _round_up(T, TT)

    # time-major, padded (padded timesteps get mask=0 -> state is carried)
    x_tbd = jnp.transpose(x_btd, (1, 0, 2))
    mask_tb1 = jnp.transpose(mask, (1, 0, 2))
    x_tbd = jnp.pad(x_tbd, ((0, T_pad - T), (0, B_pad - B), (0, 0)))
    mask_tb1 = jnp.pad(mask_tb1, ((0, T_pad - T), (0, B_pad - B), (0, 0)))

    out = x_tbd.astype(compute_dtype)
    output_states = []
    for layer in prepped["layers"]:
        D_pad = layer["D_pad"]
        if out.shape[-1] < D_pad:
            out = jnp.pad(out, ((0, 0), (0, 0), (0, D_pad - out.shape[-1])))

        # hoisted projection: one (T*B, D) @ (D, 5H) matmul for the whole seq
        x_rows = out.reshape(T_pad * B_pad, D_pad)
        xproj = _x_projection(x_rows, layer["w_x"], layer["b_x"],
                              out_dtype=compute_dtype, budget=budget)
        xproj = xproj.reshape(T_pad, B_pad, 5 * H_pad)

        out, hN, cN = _mlstm_layer(xproj, mask_tb1, layer["wmh"], layer["wh"],
                                   batch_tile=BB, seq_tile=TT,
                                   hidden_pad=H_pad, compute_dtype=compute_dtype,
                                   gate_dtype=gate_dtype, budget=budget)
        output_states.append((hN[:B, :H], cN[:B, :H]))

    y = jnp.transpose(out[:T, :B, :H], (1, 0, 2)).astype(x_btd.dtype)
    return y, output_states


def init_mlstm_params(key, input_size, hidden_size, num_layers):
    """Deterministic parameter init matching the torch module's shapes.

    Stored already transposed for `x @ W` (torch nn.Linear stores [out, in])."""
    params = []
    d_in = input_size
    for _ in range(num_layers):
        key, k1, k2, k3, k4, k5 = jax.random.split(key, 6)
        scale_in = 1.0 / np.sqrt(d_in)
        scale_h = 1.0 / np.sqrt(hidden_size)
        layer = dict(
            wmx=jax.random.uniform(k1, (d_in, hidden_size), jnp.float32,
                                   -scale_in, scale_in),
            wmh=jax.random.uniform(k2, (hidden_size, hidden_size), jnp.float32,
                                   -scale_h, scale_h),
            wx=jax.random.uniform(k3, (d_in, 4 * hidden_size), jnp.float32,
                                  -scale_in, scale_in),
            wh=jax.random.uniform(k4, (hidden_size, 4 * hidden_size), jnp.float32,
                                  -scale_h, scale_h),
            b=jax.random.uniform(k5, (1, 4 * hidden_size), jnp.float32,
                                 -scale_h, scale_h),
        )
        params.append(layer)
        d_in = hidden_size
    return params


# ----- pure-JAX reference (mirrors the PyTorch code) for a correctness check -----
def _mlstm_ref(params, x_btd, mask_bt=None):
    B, T, _ = x_btd.shape
    H = params[0]["wmx"].shape[1]
    if mask_bt is None:
        mask = jnp.ones((B, T, 1), jnp.float32)
    else:
        mask = mask_bt.astype(jnp.float32)
        if mask.ndim == 2:
            mask = mask[..., None]
    out = x_btd.astype(jnp.float32)
    states = []
    for layer in params:
        h = jnp.zeros((B, H), jnp.float32)
        c = jnp.zeros((B, H), jnp.float32)
        ys = []
        for t in range(T):
            x_t = out[:, t, :]
            m = (x_t @ layer["wmx"]) * (h @ layer["wmh"])
            gates = x_t @ layer["wx"] + m @ layer["wh"] + layer["b"]
            i_g, f_g, o_g, c_g = jnp.split(gates, 4, axis=1)
            cy = jax.nn.sigmoid(f_g) * c + jax.nn.sigmoid(i_g) * jnp.tanh(c_g)
            hy = jax.nn.sigmoid(o_g) * jnp.tanh(cy)
            mt = mask[:, t]
            hy = mt * hy + (1 - mt) * h
            cy = mt * cy + (1 - mt) * c
            h, c = hy, cy
            ys.append(hy)
        out = jnp.stack(ys, axis=1)
        states.append((h, c))
    return out, states


if __name__ == "__main__":
    B, T = 2, 8
    input_size, hidden_size, num_layers = 16, 32, 2

    key = jax.random.PRNGKey(0)
    k_param, k_x = jax.random.split(key)
    params = init_mlstm_params(k_param, input_size, hidden_size, num_layers)
    x = jax.random.normal(k_x, (B, T, input_size), jnp.float32)
    # mask with a couple of zeroed trailing steps to exercise state-carry
    mask = jnp.ones((B, T), jnp.float32).at[1, T - 2:].set(0.0)

    out_ref, states_ref = _mlstm_ref(params, x, mask)

    # f32 path, seq_tile=4 (exercises cross-tile state carry) — tight check
    out32, st32 = mlstm_forward(params, x, mask,
                                compute_dtype=jnp.float32, seq_tile=4)
    out32 = jax.block_until_ready(out32)
    np.testing.assert_allclose(np.asarray(out32), np.asarray(out_ref),
                               rtol=1e-5, atol=1e-5)
    for (h, c), (hr, cr) in zip(st32, states_ref):
        np.testing.assert_allclose(np.asarray(h), np.asarray(hr),
                                   rtol=1e-5, atol=1e-5)
        np.testing.assert_allclose(np.asarray(c), np.asarray(cr),
                                   rtol=1e-5, atol=1e-5)

    # larger batch: exercises multiple batch chunks + xproj row padding path
    B2, T2 = 10, 6
    x2 = jax.random.normal(jax.random.PRNGKey(7), (B2, T2, input_size),
                           jnp.float32)
    mask2 = jnp.ones((B2, T2), jnp.float32).at[3, T2 - 3:].set(0.0)
    out_ref2, _ = _mlstm_ref(params, x2, mask2)
    out32b, _ = mlstm_forward(params, x2, mask2, compute_dtype=jnp.float32,
                              seq_tile=3, batch_tile=8)
    out32b = jax.block_until_ready(out32b)
    np.testing.assert_allclose(np.asarray(out32b), np.asarray(out_ref2),
                               rtol=1e-5, atol=1e-5)

    # default bf16-MXU path with hoisted (prepped) weights — loose check
    prepped = prepare_mlstm_params(params, compute_dtype=jnp.bfloat16)
    outbf, stbf = mlstm_forward(prepped, x, mask)
    outbf = jax.block_until_ready(outbf)
    np.testing.assert_allclose(np.asarray(outbf), np.asarray(out_ref),
                               rtol=5e-2, atol=5e-2)

    assert out32.shape == (B, T, hidden_size)
    print("KERNEL_OK")
</pallas_src>

<mosaic_0001>
module attributes {stable_mosaic.version = 11 : i64} {
  func.func @_xproj_kernel(%arg0: i32, %arg1: i32, %arg2: memref<64x128xf32, #tpu.memory_space<vmem>>, %arg3: memref<128x640xf32, #tpu.memory_space<vmem>>, %arg4: memref<1x640xf32, #tpu.memory_space<vmem>>, %arg5: memref<64x640xf32, #tpu.memory_space<vmem>>) attributes {dimension_semantics = [#tpu.dimension_semantics<parallel>, #tpu.dimension_semantics<parallel>], iteration_bounds = array<i64: 1, 1>, scalar_prefetch = 0 : i64, scratch_operands = 0 : i64, tpu.core_type = #tpu.core_type<tc>, window_params = [{transform_indices = @transform_0, window_bounds = array<i64: 64, 128>}, {transform_indices = @transform_1, window_bounds = array<i64: 128, 640>}, {transform_indices = @transform_2, window_bounds = array<i64: 1, 640>}, {transform_indices = @transform_3, window_bounds = array<i64: 64, 640>}]} {
    %c0 = arith.constant 0 : index
    %c0_0 = arith.constant 0 : index
    %0 = vector.load %arg2[%c0, %c0_0] : memref<64x128xf32, #tpu.memory_space<vmem>>, vector<64x128xf32>
    %c0_1 = arith.constant 0 : index
    %c0_2 = arith.constant 0 : index
    %1 = vector.load %arg3[%c0_1, %c0_2] : memref<128x640xf32, #tpu.memory_space<vmem>>, vector<128x640xf32>
    %cst = arith.constant dense<0.000000e+00> : vector<64x640xf32>
    %2 = tpu.matmul %0, %1, %cst {dimension_numbers = #tpu.dot_dimension_numbers<[1], [0], [0], [1], [0, 0, 1, 1], [], []>} : vector<64x128xf32>, vector<128x640xf32>, vector<64x640xf32> -> vector<64x640xf32>
    %c0_3 = arith.constant 0 : index
    %c0_4 = arith.constant 0 : index
    %3 = vector.load %arg4[%c0_3, %c0_4] : memref<1x640xf32, #tpu.memory_space<vmem>>, vector<1x640xf32>
    %4 = vector.broadcast %3 : vector<1x640xf32> to vector<64x640xf32>
    %5 = arith.addf %2, %4 : vector<64x640xf32>
    %c0_5 = arith.constant 0 : index
    %c0_6 = arith.constant 0 : index
    %6 = vector.load %arg5[%c0_5, %c0_6] : memref<64x640xf32, #tpu.memory_space<vmem>>, vector<64x640xf32>
    tpu.vector_store %arg5[%c0_5, %c0_6], %5 {strides = array<i32>} : memref<64x640xf32, #tpu.memory_space<vmem>>, vector<64x640xf32>,
    return
  }
  func.func @transform_0(%arg0: i32, %arg1: i32) -> (i32, i32) {
    %c0_i32 = arith.constant 0 : i32
    %c0_i32_0 = arith.constant 0 : i32
    return %arg0, %c0_i32 : i32, i32
  }
  func.func @transform_1(%arg0: i32, %arg1: i32) -> (i32, i32) {
    %c0_i32 = arith.constant 0 : i32
    %c0_i32_0 = arith.constant 0 : i32
    return %c0_i32, %arg1 : i32, i32
  }
  func.func @transform_2(%arg0: i32, %arg1: i32) -> (i32, i32) {
    %c0_i32 = arith.constant 0 : i32
    %c0_i32_0 = arith.constant 0 : i32
    return %c0_i32, %arg1 : i32, i32
  }
  func.func @transform_3(%arg0: i32, %arg1: i32) -> (i32, i32) {
    %c0_i32 = arith.constant 0 : i32
    return %arg0, %arg1 : i32, i32
  }
}

</mosaic_0001>

<llo_original>
// kernel: tpu_custom_call.1
$region0: #{tpu_custom_call.1}
  #allocation0 [shape = 'u32[]', space=smem, size = 0x4, offset = 0x4, fixed_abs, tag = 'smem constant byte address 0x4 - core index']
  #allocation1 [shape = 'u32[72,128]{1,0:T(1,128)}', space=vmem, size = 0x9000, scoped, tag = 'internal scratch']
  %s0 = inlined_call_operand.hbm [shape: f32[64,128], index: 0, kind: input, shape index: {}]
  %s1 = inlined_call_operand.hbm [shape: f32[128,640], index: 1, kind: input, shape index: {}]
  %s2 = inlined_call_operand.hbm [shape: f32[1,640], index: 2, kind: input, shape index: {}]
  %s3 = inlined_call_operand.hbm [shape: f32[64,640], index: 3, kind: output, shape index: {}]
  %s4 = sld [smem:[#allocation0]]
  $region34: #{tpu_custom_call.1} parent=0
    _
  %s6 = ssub.s32 1, %s4
  %s7 = scalar_select 0, %s6, %s4
  $region1: #{tpu_custom_call.1} parent=0
    #allocation2 [shape = 'u8[32768]{0}', space=vmem, size = 0x8000, scoped, tag = 'input window, operand 0, single buffered']
    #allocation3 [shape = 's32[1]{0}', space=sflag, size = 0x4, scoped, tag = 'scoped memory for tpu_custom_call.1']
    #allocation4 [shape = 's32[1]{0}', space=sflag, size = 0x4, scoped, tag = 'scoped memory for tpu_custom_call.1']
    #allocation5 [shape = 'u8[327680]{0}', space=vmem, size = 0x50000, scoped, tag = 'input window, operand 1, single buffered']
    #allocation6 [shape = 's32[1]{0}', space=sflag, size = 0x4, scoped, tag = 'scoped memory for tpu_custom_call.1']
    #allocation7 [shape = 'u8[2560]{0}', space=vmem, size = 0xc00, scoped, tag = 'input window, operand 2, single buffered']
    #allocation8 [shape = 'u8[163840]{0}', space=vmem, size = 0x28000, scoped, tag = 'output window, operand 0, single buffered']
    %8 = vsyncpa [#allocation3], 0
    %9 = vsyncpa [#allocation6], 0
    %10 = vsyncpa [#allocation4], 0
    // Predicated region
    $region2: #{tpu_custom_call.1} parent=1 // pred_check
      _
    $region3: #{tpu_custom_call.1} parent=1 // pred_check_branch
      %12 = sbr.rel (0) target = $region5
    $region4: #{tpu_custom_call.1} parent=1 // pred_region
      %14 = vsyncadd [#allocation3], 0
      %s15 = sshll.u32 %s0, 4
      %s16 = int_to_ptr.hbm [resolvable:$true] %s15
      %s17 = sshll.u32 [#allocation2], 4
      %s18 = int_to_ptr.vmem [resolvable:$true] %s17
      %23 = dma.hbm_to_vmem [thread:$0]  %s16, 1024, %s18, [#allocation3], 128, 128, 8
    $region5: #{tpu_custom_call.1} parent=1 // pred_fallthru
      _
    // Predicated region
    $region6: #{tpu_custom_call.1} parent=1 // pred_check
      _
    $region7: #{tpu_custom_call.1} parent=1 // pred_check_branch
      %25 = sbr.rel (0) target = $region9
    $region8: #{tpu_custom_call.1} parent=1 // pred_region
      %27 = vsyncadd [#allocation6], 0
      %s28 = sshll.u32 %s1, 4
      %s29 = int_to_ptr.hbm [resolvable:$true] %s28
      %s30 = sshll.u32 [#allocation5], 4
      %s31 = int_to_ptr.vmem [resolvable:$true] %s30
      %36 = dma.hbm_to_vmem [thread:$0]  %s29, 10240, %s31, [#allocation6], 640, 640, 40
    $region9: #{tpu_custom_call.1} parent=1 // pred_fallthru
      _
    // Predicated region
    $region10: #{tpu_custom_call.1} parent=1 // pred_check
      _
    $region11: #{tpu_custom_call.1} parent=1 // pred_check_branch
      %38 = sbr.rel (0) target = $region13
    $region12: #{tpu_custom_call.1} parent=1 // pred_region
      %40 = vsyncadd [#allocation6], 0
      %s42 = sshll.u32 %s2, 4
      %s43 = int_to_ptr.hbm [resolvable:$true] %s42
      %s44 = sshll.u32 [#allocation7], 4
      %s45 = int_to_ptr.vmem [resolvable:$true] %s44
      %47 = dma.hbm_to_vmem [thread:$0]  %s43, 80, %s45, [#allocation6]
    $region13: #{tpu_custom_call.1} parent=1 // pred_fallthru
      _
    // Predicated region
    $region14: #{tpu_custom_call.1} parent=1 // pred_check
      _
    $region15: #{tpu_custom_call.1} parent=1 // pred_check_branch
      %49 = sbr.rel (0) target = $region17
    $region16: #{tpu_custom_call.1} parent=1 // pred_region
      %51 = dma.done [#allocation3], 1024
    $region17: #{tpu_custom_call.1} parent=1 // pred_fallthru
      _
    // Predicated region
    $region18: #{tpu_custom_call.1} parent=1 // pred_check
      _
    $region19: #{tpu_custom_call.1} parent=1 // pred_check_branch
      %53 = sbr.rel (0) target = $region21
    $region20: #{tpu_custom_call.1} parent=1 // pred_region
      %55 = dma.done [#allocation6], 10240
    $region21: #{tpu_custom_call.1} parent=1 // pred_fallthru
      _
    // Predicated region
    $region22: #{tpu_custom_call.1} parent=1 // pred_check
      _
    $region23: #{tpu_custom_call.1} parent=1 // pred_check_branch
      %57 = sbr.rel (0) target = $region25
    $region24: #{tpu_custom_call.1} parent=1 // pred_region
      %59 = dma.done [#allocation6], 80
    $region25: #{tpu_custom_call.1} parent=1 // pred_fallthru
      _
    %v60 = vld [vmem:[#allocation2] sm:$0xff]
    %v61 = vld [vmem:[#allocation2 + $0x8] sm:$0xff]
    %v62 = vld [vmem:[#allocation2 + $0x10] sm:$0xff]
    %v63 = vld [vmem:[#allocation2 + $0x18] sm:$0xff]
    %v64 = vld [vmem:[#allocation2 + $0x20] sm:$0xff]
    %v65 = vld [vmem:[#allocation2 + $0x28] sm:$0xff]
    %v66 = vld [vmem:[#allocation2 + $0x30] sm:$0xff]
    %v67 = vld [vmem:[#allocation2 + $0x38] sm:$0xff]
    %v68 = vld [vmem:[#allocation5] sm:$0xff]
    %v69 = vld [vmem:[#allocation5 + $0x8] sm:$0xff]
    %v70 = vld [vmem:[#allocation5 + $0x10] sm:$0xff]
    %v71 = vld [vmem:[#allocation5 + $0x18] sm:$0xff]
    %v72 = vld [vmem:[#allocation5 + $0x20] sm:$0xff]
    %v73 = vld [vmem:[#allocation5 + $0x28] sm:$0xff]
    %v74 = vld [vmem:[#allocation5 + $0x30] sm:$0xff]
    %v75 = vld [vmem:[#allocation5 + $0x38] sm:$0xff]
    %v76 = vld [vmem:[#allocation5 + $0x40] sm:$0xff]
    %v77 = vld [vmem:[#allocation5 + $0x48] sm:$0xff]
    %v78 = vld [vmem:[#allocation5 + $0x50] sm:$0xff]
    %v79 = vld [vmem:[#allocation5 + $0x58] sm:$0xff]
    %v80 = vld [vmem:[#allocation5 + $0x60] sm:$0xff]
    %v81 = vld [vmem:[#allocation5 + $0x68] sm:$0xff]
    %v82 = vld [vmem:[#allocation5 + $0x70] sm:$0xff]
    %v83 = vld [vmem:[#allocation5 + $0x78] sm:$0xff]
    %v84 = vld [vmem:[#allocation5 + $0x80] sm:$0xff]
    %v85 = vld [vmem:[#allocation5 + $0x88] sm:$0xff]
    %v86 = vld [vmem:[#allocation5 + $0x90] sm:$0xff]
    %v87 = vld [vmem:[#allocation5 + $0x98] sm:$0xff]
    %v88 = vld [vmem:[#allocation5 + $0xa0] sm:$0xff]
    %v89 = vld [vmem:[#allocation5 + $0xa8] sm:$0xff]
    %v90 = vld [vmem:[#allocation5 + $0xb0] sm:$0xff]
    %v91 = vld [vmem:[#allocation5 + $0xb8] sm:$0xff]
    %v92 = vld [vmem:[#allocation5 + $0xc0] sm:$0xff]
    %v93 = vld [vmem:[#allocation5 + $0xc8] sm:$0xff]
    %v94 = vld [vmem:[#allocation5 + $0xd0] sm:$0xff]
    %v95 = vld [vmem:[#allocation5 + $0xd8] sm:$0xff]
    %v96 = vld [vmem:[#allocation5 + $0xe0] sm:$0xff]
    %v97 = vld [vmem:[#allocation5 + $0xe8] sm:$0xff]
    %v98 = vld [vmem:[#allocation5 + $0xf0] sm:$0xff]
    %v99 = vld [vmem:[#allocation5 + $0xf8] sm:$0xff]
    %v100 = vld [vmem:[#allocation5 + $0x100] sm:$0xff]
    %v101 = vld [vmem:[#allocation5 + $0x108] sm:$0xff]
    %v102 = vld [vmem:[#allocation5 + $0x110] sm:$0xff]
    %v103 = vld [vmem:[#allocation5 + $0x118] sm:$0xff]
    %v104 = vld [vmem:[#allocation5 + $0x120] sm:$0xff]
    %v105 = vld [vmem:[#allocation5 + $0x128] sm:$0xff]
    %v106 = vld [vmem:[#allocation5 + $0x130] sm:$0xff]
    %v107 = vld [vmem:[#allocation5 + $0x138] sm:$0xff]
    %v108 = vld [vmem:[#allocation5 + $0x140] sm:$0xff]
    %v109 = vld [vmem:[#allocation5 + $0x148] sm:$0xff]
    %v110 = vld [vmem:[#allocation5 + $0x150] sm:$0xff]
    %v111 = vld [vmem:[#allocation5 + $0x158] sm:$0xff]
    %v112 = vld [vmem:[#allocation5 + $0x160] sm:$0xff]
    %v113 = vld [vmem:[#allocation5 + $0x168] sm:$0xff]
    %v114 = vld [vmem:[#allocation5 + $0x170] sm:$0xff]
    %v115 = vld [vmem:[#allocation5 + $0x178] sm:$0xff]
    %v116 = vld [vmem:[#allocation5 + $0x180] sm:$0xff]
    %v117 = vld [vmem:[#allocation5 + $0x188] sm:$0xff]
    %v118 = vld [vmem:[#allocation5 + $0x190] sm:$0xff]
    %v119 = vld [vmem:[#allocation5 + $0x198] sm:$0xff]
    %v120 = vld [vmem:[#allocation5 + $0x1a0] sm:$0xff]
    %v121 = vld [vmem:[#allocation5 + $0x1a8] sm:$0xff]
    %v122 = vld [vmem:[#allocation5 + $0x1b0] sm:$0xff]
    %v123 = vld [vmem:[#allocation5 + $0x1b8] sm:$0xff]
    %v124 = vld [vmem:[#allocation5 + $0x1c0] sm:$0xff]
    %v125 = vld [vmem:[#allocation5 + $0x1c8] sm:$0xff]
    %v126 = vld [vmem:[#allocation5 + $0x1d0] sm:$0xff]
    %v127 = vld [vmem:[#allocation5 + $0x1d8] sm:$0xff]
    %v128 = vld [vmem:[#allocation5 + $0x1e0] sm:$0xff]
    %v129 = vld [vmem:[#allocation5 + $0x1e8] sm:$0xff]
    %v130 = vld [vmem:[#allocation5 + $0x1f0] sm:$0xff]
    %v131 = vld [vmem:[#allocation5 + $0x1f8] sm:$0xff]
    %v132 = vld [vmem:[#allocation5 + $0x200] sm:$0xff]
    %v133 = vld [vmem:[#allocation5 + $0x208] sm:$0xff]
    %v134 = vld [vmem:[#allocation5 + $0x210] sm:$0xff]
    %v135 = vld [vmem:[#allocation5 + $0x218] sm:$0xff]
    %v136 = vld [vmem:[#allocation5 + $0x220] sm:$0xff]
    %v137 = vld [vmem:[#allocation5 + $0x228] sm:$0xff]
    %v138 = vld [vmem:[#allocation5 + $0x230] sm:$0xff]
    %v139 = vld [vmem:[#allocation5 + $0x238] sm:$0xff]
    %v140 = vld [vmem:[#allocation5 + $0x240] sm:$0xff]
    %v141 = vld [vmem:[#allocation5 + $0x248] sm:$0xff]
    %v142 = vld [vmem:[#allocation5 + $0x250] sm:$0xff]
    %v143 = vld [vmem:[#allocation5 + $0x258] sm:$0xff]
    %v144 = vld [vmem:[#allocation5 + $0x260] sm:$0xff]
    %v145 = vld [vmem:[#allocation5 + $0x268] sm:$0xff]
    %v146 = vld [vmem:[#allocation5 + $0x270] sm:$0xff]
    %v147 = vld [vmem:[#allocation5 + $0x278] sm:$0xff]
    %v148 = vld [vmem:[#allocation7] sm:$0x1f]
    %v150 = vperm.slane %v148, 0
    %v151 = vperm.slane %v148, 1
    %v152 = vperm.slane %v148, 2
    %v153 = vperm.slane %v148, 3
    %v154 = vperm.slane %v148, 4
    %160 = vmatpush.msra.mxu0 %v143
    %161 = vmatpush.msra.mxu0 %v138
    %162 = vmatpush.msra.mxu0 %v133
    %163 = vmatpush.msra.mxu0 %v128
    %164 = vmatpush.msra.mxu0 %v123
    %165 = vmatpush.msra.mxu0 %v118
    %166 = vmatpush.msra.mxu0 %v113
    %167 = vmatpush.msra.mxu0 %v108
    %168 = vmatpush.msra.mxu0 %v103
    %169 = vmatpush.msra.mxu0 %v98
    %170 = vmatpush.msra.mxu0 %v93
    %171 = vmatpush.msra.mxu0 %v88
    %172 = vmatpush.msra.mxu0 %v83
    %173 = vmatpush.msra.mxu0 %v78
    %174 = vmatpush.msra.mxu0 %v73
    %175 = vmatpush.msra.mxu0 %v68
    %176 = vmatmul.f32.gmra.mxu0 %v60
    %v177 = vpop.f32.mrf.mxu0
    %v178 = vadd.f32 %v150, %v177
    %179 = vmatmul.f32.gmra.mxu0 %v61
    %v180 = vpop.f32.mrf.mxu0
    %v181 = vadd.f32 %v150, %v180
    %182 = vmatmul.f32.gmra.mxu0 %v62
    %v183 = vpop.f32.mrf.mxu0
    %v184 = vadd.f32 %v150, %v183
    %185 = vmatmul.f32.gmra.mxu0 %v63
    %v186 = vpop.f32.mrf.mxu0
    %v187 = vadd.f32 %v150, %v186
    %188 = vmatmul.f32.gmra.mxu0 %v64
    %v189 = vpop.f32.mrf.mxu0
    %v190 = vadd.f32 %v150, %v189
    %191 = vmatmul.f32.gmra.mxu0 %v65
    %v192 = vpop.f32.mrf.mxu0
    %v193 = vadd.f32 %v150, %v192
    %194 = vmatmul.f32.gmra.mxu0 %v66
    %v195 = vpop.f32.mrf.mxu0
    %v196 = vadd.f32 %v150, %v195
    %197 = vmatmul.f32.gmra.mxu0 %v67
    %v198 = vpop.f32.mrf.mxu0
    %v199 = vadd.f32 %v150, %v198
    %200 = vdwg.mxu0
    %201 = vmatpush.msra.mxu0 %v144
    %202 = vmatpush.msra.mxu0 %v139
    %203 = vmatpush.msra.mxu0 %v134
    %204 = vmatpush.msra.mxu0 %v129
    %205 = vmatpush.msra.mxu0 %v124
    %206 = vmatpush.msra.mxu0 %v119
    %207 = vmatpush.msra.mxu0 %v114
    %208 = vmatpush.msra.mxu0 %v109
    %209 = vmatpush.msra.mxu0 %v104
    %210 = vmatpush.msra.mxu0 %v99
    %211 = vmatpush.msra.mxu0 %v94
    %212 = vmatpush.msra.mxu0 %v89
    %213 = vmatpush.msra.mxu0 %v84
    %214 = vmatpush.msra.mxu0 %v79
    %215 = vmatpush.msra.mxu0 %v74
    %216 = vmatpush.msra.mxu0 %v69
    %217 = vmatmul.f32.gmra.mxu0 %v60
    %v218 = vpop.f32.mrf.mxu0
    %v219 = vadd.f32 %v151, %v218
    %220 = vmatmul.f32.gmra.mxu0 %v61
    %v221 = vpop.f32.mrf.mxu0
    %v222 = vadd.f32 %v151, %v221
    %223 = vmatmul.f32.gmra.mxu0 %v62
    %v224 = vpop.f32.mrf.mxu0
    %v225 = vadd.f32 %v151, %v224
    %226 = vmatmul.f32.gmra.mxu0 %v63
    %v227 = vpop.f32.mrf.mxu0
    %v228 = vadd.f32 %v151, %v227
    %229 = vmatmul.f32.gmra.mxu0 %v64
    %v230 = vpop.f32.mrf.mxu0
    %v231 = vadd.f32 %v151, %v230
    %232 = vmatmul.f32.gmra.mxu0 %v65
    %v233 = vpop.f32.mrf.mxu0
    %v234 = vadd.f32 %v151, %v233
    %235 = vmatmul.f32.gmra.mxu0 %v66
    %v236 = vpop.f32.mrf.mxu0
    %v237 = vadd.f32 %v151, %v236
    %238 = vmatmul.f32.gmra.mxu0 %v67
    %v239 = vpop.f32.mrf.mxu0
    %v240 = vadd.f32 %v151, %v239
    %241 = vdwg.mxu0
    %242 = vmatpush.msra.mxu0 %v145
    %243 = vmatpush.msra.mxu0 %v140
    %244 = vmatpush.msra.mxu0 %v135
    %245 = vmatpush.msra.mxu0 %v130
    %246 = vmatpush.msra.mxu0 %v125
    %247 = vmatpush.msra.mxu0 %v120
    %248 = vmatpush.msra.mxu0 %v115
    %249 = vmatpush.msra.mxu0 %v110
    %250 = vmatpush.msra.mxu0 %v105
    %251 = vmatpush.msra.mxu0 %v100
    %252 = vmatpush.msra.mxu0 %v95
    %253 = vmatpush.msra.mxu0 %v90
    %254 = vmatpush.msra.mxu0 %v85
    %255 = vmatpush.msra.mxu0 %v80
    %256 = vmatpush.msra.mxu0 %v75
    %257 = vmatpush.msra.mxu0 %v70
    %258 = vmatmul.f32.gmra.mxu0 %v60
    %v259 = vpop.f32.mrf.mxu0
    %v260 = vadd.f32 %v152, %v259
    %261 = vmatmul.f32.gmra.mxu0 %v61
    %v262 = vpop.f32.mrf.mxu0
    %v263 = vadd.f32 %v152, %v262
    %264 = vmatmul.f32.gmra.mxu0 %v62
    %v265 = vpop.f32.mrf.mxu0
    %v266 = vadd.f32 %v152, %v265
    %267 = vmatmul.f32.gmra.mxu0 %v63
    %v268 = vpop.f32.mrf.mxu0
    %v269 = vadd.f32 %v152, %v268
    %270 = vmatmul.f32.gmra.mxu0 %v64
    %v271 = vpop.f32.mrf.mxu0
    %v272 = vadd.f32 %v152, %v271
    %273 = vmatmul.f32.gmra.mxu0 %v65
    %v274 = vpop.f32.mrf.mxu0
    %v275 = vadd.f32 %v152, %v274
    %276 = vmatmul.f32.gmra.mxu0 %v66
    %v277 = vpop.f32.mrf.mxu0
    %v278 = vadd.f32 %v152, %v277
    %279 = vmatmul.f32.gmra.mxu0 %v67
    %v280 = vpop.f32.mrf.mxu0
    %v281 = vadd.f32 %v152, %v280
    %282 = vdwg.mxu0
    %283 = vmatpush.msra.mxu0 %v146
    %284 = vmatpush.msra.mxu0 %v141
    %285 = vmatpush.msra.mxu0 %v136
    %286 = vmatpush.msra.mxu0 %v131
    %287 = vmatpush.msra.mxu0 %v126
    %288 = vmatpush.msra.mxu0 %v121
    %289 = vmatpush.msra.mxu0 %v116
    %290 = vmatpush.msra.mxu0 %v111
    %291 = vmatpush.msra.mxu0 %v106
    %292 = vmatpush.msra.mxu0 %v101
    %293 = vmatpush.msra.mxu0 %v96
    %294 = vmatpush.msra.mxu0 %v91
    %295 = vmatpush.msra.mxu0 %v86
    %296 = vmatpush.msra.mxu0 %v81
    %297 = vmatpush.msra.mxu0 %v76
    %298 = vmatpush.msra.mxu0 %v71
    %299 = vmatmul.f32.gmra.mxu0 %v60
    %v300 = vpop.f32.mrf.mxu0
    %v301 = vadd.f32 %v153, %v300
    %302 = vmatmul.f32.gmra.mxu0 %v61
    %v303 = vpop.f32.mrf.mxu0
    %v304 = vadd.f32 %v153, %v303
    %305 = vmatmul.f32.gmra.mxu0 %v62
    %v306 = vpop.f32.mrf.mxu0
    %v307 = vadd.f32 %v153, %v306
    %308 = vmatmul.f32.gmra.mxu0 %v63
    %v309 = vpop.f32.mrf.mxu0
    %v310 = vadd.f32 %v153, %v309
    %311 = vmatmul.f32.gmra.mxu0 %v64
    %v312 = vpop.f32.mrf.mxu0
    %v313 = vadd.f32 %v153, %v312
    %314 = vmatmul.f32.gmra.mxu0 %v65
    %v315 = vpop.f32.mrf.mxu0
    %v316 = vadd.f32 %v153, %v315
    %317 = vmatmul.f32.gmra.mxu0 %v66
    %v318 = vpop.f32.mrf.mxu0
    %v319 = vadd.f32 %v153, %v318
    %320 = vmatmul.f32.gmra.mxu0 %v67
    %v321 = vpop.f32.mrf.mxu0
    %v322 = vadd.f32 %v153, %v321
    %323 = vdwg.mxu0
    %324 = vmatpush.msra.mxu0 %v147
    %325 = vmatpush.msra.mxu0 %v142
    %326 = vmatpush.msra.mxu0 %v137
    %327 = vmatpush.msra.mxu0 %v132
    %328 = vmatpush.msra.mxu0 %v127
    %329 = vmatpush.msra.mxu0 %v122
    %330 = vmatpush.msra.mxu0 %v117
    %331 = vmatpush.msra.mxu0 %v112
    %332 = vmatpush.msra.mxu0 %v107
    %333 = vmatpush.msra.mxu0 %v102
    %334 = vmatpush.msra.mxu0 %v97
    %335 = vmatpush.msra.mxu0 %v92
    %336 = vmatpush.msra.mxu0 %v87
    %337 = vmatpush.msra.mxu0 %v82
    %338 = vmatpush.msra.mxu0 %v77
    %339 = vmatpush.msra.mxu0 %v72
    %340 = vmatmul.f32.gmra.mxu0 %v60
    %v341 = vpop.f32.mrf.mxu0
    %v342 = vadd.f32 %v154, %v341
    %343 = vmatmul.f32.gmra.mxu0 %v61
    %v344 = vpop.f32.mrf.mxu0
    %v345 = vadd.f32 %v154, %v344
    %346 = vmatmul.f32.gmra.mxu0 %v62
    %v347 = vpop.f32.mrf.mxu0
    %v348 = vadd.f32 %v154, %v347
    %349 = vmatmul.f32.gmra.mxu0 %v63
    %v350 = vpop.f32.mrf.mxu0
    %v351 = vadd.f32 %v154, %v350
    %352 = vmatmul.f32.gmra.mxu0 %v64
    %v353 = vpop.f32.mrf.mxu0
    %v354 = vadd.f32 %v154, %v353
    %355 = vmatmul.f32.gmra.mxu0 %v65
    %v356 = vpop.f32.mrf.mxu0
    %v357 = vadd.f32 %v154, %v356
    %358 = vmatmul.f32.gmra.mxu0 %v66
    %v359 = vpop.f32.mrf.mxu0
    %v360 = vadd.f32 %v154, %v359
    %361 = vmatmul.f32.gmra.mxu0 %v67
    %v362 = vpop.f32.mrf.mxu0
    %v363 = vadd.f32 %v154, %v362
    %364 = vdwg.mxu0
    %365 = vst [vmem:[#allocation8] sm:$0xff] %v178
    %366 = vst [vmem:[#allocation8 + $0x8] sm:$0xff] %v219
    %367 = vst [vmem:[#allocation8 + $0x10] sm:$0xff] %v260
    %368 = vst [vmem:[#allocation8 + $0x18] sm:$0xff] %v301
    %369 = vst [vmem:[#allocation8 + $0x20] sm:$0xff] %v342
    %370 = vst [vmem:[#allocation8 + $0x28] sm:$0xff] %v181
    %371 = vst [vmem:[#allocation8 + $0x30] sm:$0xff] %v222
    %372 = vst [vmem:[#allocation8 + $0x38] sm:$0xff] %v263
    %373 = vst [vmem:[#allocation8 + $0x40] sm:$0xff] %v304
    %374 = vst [vmem:[#allocation8 + $0x48] sm:$0xff] %v345
    %375 = vst [vmem:[#allocation8 + $0x50] sm:$0xff] %v184
    %376 = vst [vmem:[#allocation8 + $0x58] sm:$0xff] %v225
    %377 = vst [vmem:[#allocation8 + $0x60] sm:$0xff] %v266
    %378 = vst [vmem:[#allocation8 + $0x68] sm:$0xff] %v307
    %379 = vst [vmem:[#allocation8 + $0x70] sm:$0xff] %v348
    %380 = vst [vmem:[#allocation8 + $0x78] sm:$0xff] %v187
    %381 = vst [vmem:[#allocation8 + $0x80] sm:$0xff] %v228
    %382 = vst [vmem:[#allocation8 + $0x88] sm:$0xff] %v269
    %383 = vst [vmem:[#allocation8 + $0x90] sm:$0xff] %v310
    %384 = vst [vmem:[#allocation8 + $0x98] sm:$0xff] %v351
    %385 = vst [vmem:[#allocation8 + $0xa0] sm:$0xff] %v190
    %386 = vst [vmem:[#allocation8 + $0xa8] sm:$0xff] %v231
    %387 = vst [vmem:[#allocation8 + $0xb0] sm:$0xff] %v272
    %388 = vst [vmem:[#allocation8 + $0xb8] sm:$0xff] %v313
    %389 = vst [vmem:[#allocation8 + $0xc0] sm:$0xff] %v354
    %390 = vst [vmem:[#allocation8 + $0xc8] sm:$0xff] %v193
    %391 = vst [vmem:[#allocation8 + $0xd0] sm:$0xff] %v234
    %392 = vst [vmem:[#allocation8 + $0xd8] sm:$0xff] %v275
    %393 = vst [vmem:[#allocation8 + $0xe0] sm:$0xff] %v316
    %394 = vst [vmem:[#allocation8 + $0xe8] sm:$0xff] %v357
    %395 = vst [vmem:[#allocation8 + $0xf0] sm:$0xff] %v196
    %396 = vst [vmem:[#allocation8 + $0xf8] sm:$0xff] %v237
    %397 = vst [vmem:[#allocation8 + $0x100] sm:$0xff] %v278
    %398 = vst [vmem:[#allocation8 + $0x108] sm:$0xff] %v319
    %399 = vst [vmem:[#allocation8 + $0x110] sm:$0xff] %v360
    %400 = vst [vmem:[#allocation8 + $0x118] sm:$0xff] %v199
    %401 = vst [vmem:[#allocation8 + $0x120] sm:$0xff] %v240
    %402 = vst [vmem:[#allocation8 + $0x128] sm:$0xff] %v281
    %403 = vst [vmem:[#allocation8 + $0x130] sm:$0xff] %v322
    %404 = vst [vmem:[#allocation8 + $0x138] sm:$0xff] %v363
    // Predicated region
    $region26: #{tpu_custom_call.1} parent=1 // pred_check
      _
    $region27: #{tpu_custom_call.1} parent=1 // pred_check_branch
      %406 = sbr.rel (0) target = $region29
    $region28: #{tpu_custom_call.1} parent=1 // pred_region
      %408 = vsyncadd [#allocation4], 0
      %s409 = sshll.u32 [#allocation8], 4
      %s410 = int_to_ptr.vmem [resolvable:$true] %s409
      %s411 = sshll.u32 %s3, 4
      %s412 = int_to_ptr.hbm [resolvable:$true] %s411
      %417 = dma.vmem_to_hbm [thread:$0]  %s410, 5120, %s412, [#allocation4], 640, 640, 40
    $region29: #{tpu_custom_call.1} parent=1 // pred_fallthru
      _
    // Predicated region
    $region30: #{tpu_custom_call.1} parent=1 // pred_check
      _
    $region31: #{tpu_custom_call.1} parent=1 // pred_check_branch
      %419 = sbr.rel (0) target = $region33
    $region32: #{tpu_custom_call.1} parent=1 // pred_region
      %421 = dma.done [#allocation4], 5120
    $region33: #{tpu_custom_call.1} parent=1 // pred_fallthru
      _
    %422 = vsyncpa [#allocation3], 1
    %423 = vsyncpa [#allocation6], 1
    %424 = vsyncpa [#allocation4], 1

</llo_original>
